<compile_context>
chip_gen: v7x
topology: tpu7x:2x2x1
jax: 0.10.0
libtpu: 0.0.40
codegen_flags: <defaults>
</compile_context>

<pallas_src>
import jax
import jax.numpy as jnp
import numpy as np
from jax import lax
from jax.experimental import pallas as pl
from jax.experimental.pallas import tpu as pltpu


def _roi_pool_kernel(tbl_ref, x_ref, out_ref):
    """Max-pool one ROI (one channel tile) over precomputed bin boundaries.

    tbl_ref : SMEM int32, shape (1 + 2*outh + 2*outw, N) scalar-prefetch table:
              row 0                      -> batch index (clamped)
              rows 1        .. outh      -> hstart[ph]  (clipped to [0, H])
              rows 1+outh   .. 2*outh    -> hend[ph]
              rows 1+2*outh .. +outw     -> wstart[pw]  (clipped to [0, W])
              rows 1+2*outh+outw ..      -> wend[pw]
    x_ref   : VMEM (1, H, W, c_tile) NHWC feature-map slab (channels on lanes).
    out_ref : VMEM (1, outh, outw, c_tile) float32.
    """
    _, H, W, c_tile = x_ref.shape
    _, outh, outw, _ = out_ref.shape
    n = pl.program_id(1)

    dt = x_ref.dtype
    # -inf sentinel: matches the CUDA max except for NaN inputs (CUDA's
    # `data > maxval` drops NaN; jnp.maximum propagates it).
    neg_row = jnp.full((W, c_tile), -jnp.inf, dtype=dt)
    neg_scalar = jnp.array(-jnp.inf, dtype=dt)

    # ---- pw-only work hoisted out of the ph loop ----------------------------
    w_iota = lax.broadcasted_iota(jnp.int32, (W, 1), 0)
    w_masks = []
    w_empty = []
    for pw in range(outw):
        ws = tbl_ref[1 + 2 * outh + pw, n]
        we = tbl_ref[1 + 2 * outh + outw + pw, n]
        w_masks.append((w_iota >= ws) & (w_iota < we))       # (W, 1)
        w_empty.append(we <= ws)

    rows = []
    for ph in range(outh):
        hs = tbl_ref[1 + ph, n]
        he = tbl_ref[1 + outh + ph, n]
        h_empty = he <= hs

        # Running max over only the rows inside [hs, he): pure VPU work per
        # row, no full-map masked temporary, each needed row read exactly once.
        def h_body(h, carry):
            return jnp.maximum(carry, x_ref[0, h])           # (W, c_tile)

        row_max = lax.fori_loop(hs, he, h_body, neg_row)     # (W, c_tile)

        bins = []
        for pw in range(outw):
            # Small masked sublane reduce of (W, c_tile).
            mx = jnp.max(jnp.where(w_masks[pw], row_max, neg_scalar),
                         axis=0, keepdims=True)              # (1, c_tile)
            empty = jnp.logical_or(h_empty, w_empty[pw])
            bins.append(jnp.where(empty, jnp.zeros_like(mx), mx))
        rows.append(jnp.concatenate(bins, axis=0)[None])     # (1, outw, c_tile)

    # Single lane-dense store of the whole (outh, outw, c_tile) tile.
    out_ref[0] = jnp.concatenate(rows, axis=0).astype(out_ref.dtype)


def _c_round(v):
    # C round(): half away from zero.
    return jnp.sign(v) * jnp.floor(jnp.abs(v) + 0.5)


def _vmem_plan():
    """(per-block byte budget, vmem_limit cap) tuned per TPU generation."""
    try:
        cap = int(pltpu.get_tpu_info().vmem_capacity_bytes)
    except Exception:
        cap = 128 << 20
    if cap <= (96 << 20):            # v7x: 64 MiB per TensorCore
        return 12 << 20, 46 << 20
    return 44 << 20, 100 << 20       # v5e / v6e: 128 MiB


def _plan_channel_tiling(C, H, W, itemsize, budget_bytes):
    """Return (C_padded, c_tile) so the input block fits the block budget."""
    if C * H * W * itemsize <= budget_bytes:
        return C, C                  # whole-C block: no padding, no tiling
    # Tiling needed: lane-axis tiles must be multiples of 128 -> pad C up.
    c_pad = -(-C // 128) * 128
    t = (budget_bytes // (H * W * itemsize)) // 128 * 128
    t = int(min(max(t, 128), c_pad))
    while c_pad % t != 0:            # keep tiles that evenly divide padded C
        t -= 128
    return c_pad, t


def roi_pooling_2d(x_nchw, rois, outh, outw, spatial_scale):
    """x_nchw: (B, C, H, W) float; rois: (N, 5) float [b, x1, y1, x2, y2]."""
    assert jnp.issubdtype(x_nchw.dtype, jnp.floating), "feature map must be float"
    B, C, H, W = x_nchw.shape
    N = rois.shape[0]

    # ---- per-ROI integer bin boundaries, computed once outside the kernel ----
    batch_idx = jnp.clip(rois[:, 0].astype(jnp.int32), 0, B - 1)
    coords = _c_round(rois[:, 1:5] * spatial_scale).astype(jnp.int32)
    roi_start_w, roi_start_h = coords[:, 0], coords[:, 1]
    roi_end_w, roi_end_h = coords[:, 2], coords[:, 3]
    roi_w = jnp.maximum(roi_end_w - roi_start_w + 1, 1).astype(jnp.float32)
    roi_h = jnp.maximum(roi_end_h - roi_start_h + 1, 1).astype(jnp.float32)
    bin_h = roi_h / jnp.float32(outh)                    # (N,)
    bin_w = roi_w / jnp.float32(outw)

    ph = jnp.arange(outh, dtype=jnp.float32)[None, :]    # (1, outh)
    pw = jnp.arange(outw, dtype=jnp.float32)[None, :]    # (1, outw)
    hstart = jnp.clip(jnp.floor(ph * bin_h[:, None]).astype(jnp.int32)
                      + roi_start_h[:, None], 0, H)
    hend = jnp.clip(jnp.ceil((ph + 1.0) * bin_h[:, None]).astype(jnp.int32)
                    + roi_start_h[:, None], 0, H)
    wstart = jnp.clip(jnp.floor(pw * bin_w[:, None]).astype(jnp.int32)
                      + roi_start_w[:, None], 0, W)
    wend = jnp.clip(jnp.ceil((pw + 1.0) * bin_w[:, None]).astype(jnp.int32)
                    + roi_start_w[:, None], 0, W)

    # ---- sort ROIs by batch index so consecutive grid steps reuse the DMA ----
    order = jnp.argsort(batch_idx)
    inv_order = jnp.argsort(order)
    tbl = jnp.concatenate(
        [batch_idx[:, None], hstart, hend, wstart, wend], axis=1
    ).astype(jnp.int32)                                  # (N, 1 + 2*outh + 2*outw)
    tbl = jnp.transpose(tbl[order])                      # (rows, N): long axis last

    # ---- NHWC relayout (channels -> lanes) + generation-aware tiling ---------
    itemsize = jnp.dtype(x_nchw.dtype).itemsize
    block_budget, limit_cap = _vmem_plan()
    c_pad, c_tile = _plan_channel_tiling(C, H, W, itemsize, block_budget)
    x_nhwc = jnp.transpose(x_nchw, (0, 2, 3, 1))         # one-time HBM relayout
    if c_pad != C:
        x_nhwc = jnp.pad(x_nhwc, ((0, 0), (0, 0), (0, 0), (0, c_pad - C)))
    n_c = c_pad // c_tile

    in_block_bytes = H * W * c_tile * itemsize
    out_block_bytes = outh * outw * c_tile * 4
    vmem_limit = int(min(max(2 * (in_block_bytes + out_block_bytes) + (6 << 20),
                             16 << 20), limit_cap))

    out_nhwc = pl.pallas_call(
        _roi_pool_kernel,
        out_shape=jax.ShapeDtypeStruct((N, outh, outw, c_pad), jnp.float32),
        grid_spec=pltpu.PrefetchScalarGridSpec(
            num_scalar_prefetch=1,
            grid=(n_c, N),                               # channel tiles outer, ROIs inner
            in_specs=[
                # NHWC slab of this ROI's (sorted) batch element; the block
                # index repeats for consecutive ROIs of the same batch, so
                # Pallas skips the re-DMA.
                pl.BlockSpec((1, H, W, c_tile),
                             lambda c, n, tbl: (tbl[0, n], 0, 0, c)),
            ],
            out_specs=pl.BlockSpec((1, outh, outw, c_tile),
                                   lambda c, n, tbl: (n, 0, 0, c)),
        ),
        compiler_params=pltpu.CompilerParams(
            dimension_semantics=("parallel", "parallel"),
            vmem_limit_bytes=vmem_limit,
        ),
    )(tbl, x_nhwc)

    # Undo the ROI sort, drop channel padding, return NCHW like the module.
    out = out_nhwc[inv_order][..., :C]
    return jnp.transpose(out, (0, 3, 1, 2))              # (N, C, outh, outw)


def _roi_pool_ref(x_nchw, rois, outh, outw, spatial_scale):
    """NumPy port of the CUDA roi_forward kernel (semantic reference)."""
    x = np.asarray(x_nchw, dtype=np.float32)
    rois = np.asarray(rois, dtype=np.float32)
    B, C, H, W = x.shape
    N = rois.shape[0]
    out = np.zeros((N, C, outh, outw), dtype=np.float32)

    def cround(v):
        return np.sign(v) * np.floor(np.abs(v) + 0.5)

    for n in range(N):
        b = int(rois[n, 0])
        rsw = int(cround(rois[n, 1] * spatial_scale))
        rsh = int(cround(rois[n, 2] * spatial_scale))
        rew = int(cround(rois[n, 3] * spatial_scale))
        reh = int(cround(rois[n, 4] * spatial_scale))
        rw = max(rew - rsw + 1, 1)
        rh = max(reh - rsh + 1, 1)
        bh = rh / float(outh)
        bw = rw / float(outw)
        for c in range(C):
            for ph in range(outh):
                hs = min(max(int(np.floor(ph * bh)) + rsh, 0), H)
                he = min(max(int(np.ceil((ph + 1) * bh)) + rsh, 0), H)
                for pw in range(outw):
                    ws = min(max(int(np.floor(pw * bw)) + rsw, 0), W)
                    we = min(max(int(np.ceil((pw + 1) * bw)) + rsw, 0), W)
                    if he <= hs or we <= ws:
                        out[n, c, ph, pw] = 0.0
                    else:
                        out[n, c, ph, pw] = x[b, c, hs:he, ws:we].max()
    return out


if __name__ == "__main__":
    key = jax.random.PRNGKey(0)
    B, C, H, W = 2, 4, 16, 16
    N = 6
    outh, outw = 4, 4
    spatial_scale = 0.5

    kx, kc = jax.random.split(key)
    x = jax.random.normal(kx, (B, C, H, W), dtype=jnp.float32)

    # Deterministic ROIs: [batch_idx, x1, y1, x2, y2] in original-image coords.
    batch_idx = (jnp.arange(N) % B).astype(jnp.float32)
    raw = jax.random.uniform(kc, (N, 4), minval=0.0, maxval=31.0)
    x1 = jnp.minimum(raw[:, 0], raw[:, 2])
    x2 = jnp.maximum(raw[:, 0], raw[:, 2])
    y1 = jnp.minimum(raw[:, 1], raw[:, 3])
    y2 = jnp.maximum(raw[:, 1], raw[:, 3])
    rois = jnp.stack([batch_idx, x1, y1, x2, y2], axis=1)

    out = roi_pooling_2d(x, rois, outh, outw, spatial_scale)
    out = jax.block_until_ready(out)

    ref = _roi_pool_ref(np.asarray(x), np.asarray(rois), outh, outw, spatial_scale)
    np.testing.assert_allclose(np.asarray(out), ref, rtol=1e-6, atol=1e-6)

    print("KERNEL_OK")
</pallas_src>

<mosaic_0001>
module attributes {stable_mosaic.version = 11 : i64} {
  func.func @_roi_pool_kernel(%arg0: i32, %arg1: i32, %arg2: memref<17x6xi32, #tpu.memory_space<smem>>, %arg3: memref<1x16x16x4xf32, #tpu.memory_space<vmem>>, %arg4: memref<1x4x4x4xf32, #tpu.memory_space<vmem>>) attributes {dimension_semantics = [#tpu.dimension_semantics<parallel>, #tpu.dimension_semantics<parallel>], iteration_bounds = array<i64: 1, 6>, scalar_prefetch = 1 : i64, scratch_operands = 0 : i64, tpu.core_type = #tpu.core_type<tc>, window_params = [{transform_indices = @transform_0, window_bounds = array<i64: 1, 16, 16, 4>}, {transform_indices = @transform_1, window_bounds = array<i64: 1, 4, 4, 4>}]} {
    %cst = arith.constant 0xFF800000 : f32
    %0 = vector.broadcast %cst : f32 to vector<16x4xf32>
    %1 = tpu.iota {dimensions = array<i32: 0>} : vector<16x1xi32>
    %c9 = arith.constant 9 : index
    %2 = arith.index_cast %arg1 : i32 to index
    %3 = memref.load %arg2[%c9, %2] : memref<17x6xi32, #tpu.memory_space<smem>>
    %c13 = arith.constant 13 : index
    %4 = arith.index_cast %arg1 : i32 to index
    %5 = memref.load %arg2[%c13, %4] : memref<17x6xi32, #tpu.memory_space<smem>>
    %6 = vector.broadcast %3 : i32 to vector<16x1xi32>
    %7 = arith.cmpi sge, %1, %6 : vector<16x1xi32>
    %8 = vector.broadcast %5 : i32 to vector<16x1xi32>
    %9 = arith.cmpi slt, %1, %8 : vector<16x1xi32>
    %10 = arith.andi %7, %9 : vector<16x1xi1>
    %11 = arith.cmpi sle, %5, %3 : i32
    %c10 = arith.constant 10 : index
    %12 = arith.index_cast %arg1 : i32 to index
    %13 = memref.load %arg2[%c10, %12] : memref<17x6xi32, #tpu.memory_space<smem>>
    %c14 = arith.constant 14 : index
    %14 = arith.index_cast %arg1 : i32 to index
    %15 = memref.load %arg2[%c14, %14] : memref<17x6xi32, #tpu.memory_space<smem>>
    %16 = vector.broadcast %13 : i32 to vector<16x1xi32>
    %17 = arith.cmpi sge, %1, %16 : vector<16x1xi32>
    %18 = vector.broadcast %15 : i32 to vector<16x1xi32>
    %19 = arith.cmpi slt, %1, %18 : vector<16x1xi32>
    %20 = arith.andi %17, %19 : vector<16x1xi1>
    %21 = arith.cmpi sle, %15, %13 : i32
    %c11 = arith.constant 11 : index
    %22 = arith.index_cast %arg1 : i32 to index
    %23 = memref.load %arg2[%c11, %22] : memref<17x6xi32, #tpu.memory_space<smem>>
    %c15 = arith.constant 15 : index
    %24 = arith.index_cast %arg1 : i32 to index
    %25 = memref.load %arg2[%c15, %24] : memref<17x6xi32, #tpu.memory_space<smem>>
    %26 = vector.broadcast %23 : i32 to vector<16x1xi32>
    %27 = arith.cmpi sge, %1, %26 : vector<16x1xi32>
    %28 = vector.broadcast %25 : i32 to vector<16x1xi32>
    %29 = arith.cmpi slt, %1, %28 : vector<16x1xi32>
    %30 = arith.andi %27, %29 : vector<16x1xi1>
    %31 = arith.cmpi sle, %25, %23 : i32
    %c12 = arith.constant 12 : index
    %32 = arith.index_cast %arg1 : i32 to index
    %33 = memref.load %arg2[%c12, %32] : memref<17x6xi32, #tpu.memory_space<smem>>
    %c16 = arith.constant 16 : index
    %34 = arith.index_cast %arg1 : i32 to index
    %35 = memref.load %arg2[%c16, %34] : memref<17x6xi32, #tpu.memory_space<smem>>
    %36 = vector.broadcast %33 : i32 to vector<16x1xi32>
    %37 = arith.cmpi sge, %1, %36 : vector<16x1xi32>
    %38 = vector.broadcast %35 : i32 to vector<16x1xi32>
    %39 = arith.cmpi slt, %1, %38 : vector<16x1xi32>
    %40 = arith.andi %37, %39 : vector<16x1xi1>
    %41 = arith.cmpi sle, %35, %33 : i32
    %c1 = arith.constant 1 : index
    %42 = arith.index_cast %arg1 : i32 to index
    %43 = memref.load %arg2[%c1, %42] : memref<17x6xi32, #tpu.memory_space<smem>>
    %c5 = arith.constant 5 : index
    %44 = arith.index_cast %arg1 : i32 to index
    %45 = memref.load %arg2[%c5, %44] : memref<17x6xi32, #tpu.memory_space<smem>>
    %46 = arith.cmpi sle, %45, %43 : i32
    %47 = arith.subi %45, %43 : i32
    %48 = arith.addi %43, %47 : i32
    %c1_i32 = arith.constant 1 : i32
    %49 = scf.for %arg5 = %43 to %48 step %c1_i32 iter_args(%arg6 = %0) -> (vector<16x4xf32>)  : i32 {
      %c0_54 = arith.constant 0 : index
      %230 = arith.index_cast %arg5 : i32 to index
      %c0_55 = arith.constant 0 : index
      %c0_56 = arith.constant 0 : index
      %231 = vector.load %arg3[%c0_54, %230, %c0_55, %c0_56] : memref<1x16x16x4xf32, #tpu.memory_space<vmem>>, vector<1x1x16x4xf32>
      %232 = vector.shape_cast %231 : vector<1x1x16x4xf32> to vector<16x4xf32>
      %233 = arith.maximumf %arg6, %232 : vector<16x4xf32>
      scf.yield %233 : vector<16x4xf32>
    }
    %cst_0 = arith.constant 0xFF800000 : f32
    %50 = vector.shape_cast %10 : vector<16x1xi1> to vector<16x1xi1>
    %51 = vector.broadcast %50 : vector<16x1xi1> to vector<16x4xi1>
    %52 = vector.broadcast %cst_0 : f32 to vector<16x4xf32>
    %53 = arith.select %51, %49, %52 : vector<16x4xi1>, vector<16x4xf32>
    %cst_1 = arith.constant dense<0xFF800000> : vector<4xf32>
    %54 = vector.multi_reduction <maximumf>, %53, %cst_1 [0] : vector<16x4xf32> to vector<4xf32>
    %55 = vector.shape_cast %54 : vector<4xf32> to vector<1x4xf32>
    %56 = arith.ori %46, %11 : i1
    %cst_2 = arith.constant 0.000000e+00 : f32
    %57 = vector.broadcast %cst_2 : f32 to vector<1x4xf32>
    %58 = arith.select %56, %57, %55 : vector<1x4xf32>
    %cst_3 = arith.constant 0xFF800000 : f32
    %59 = vector.shape_cast %20 : vector<16x1xi1> to vector<16x1xi1>
    %60 = vector.broadcast %59 : vector<16x1xi1> to vector<16x4xi1>
    %61 = vector.broadcast %cst_3 : f32 to vector<16x4xf32>
    %62 = arith.select %60, %49, %61 : vector<16x4xi1>, vector<16x4xf32>
    %cst_4 = arith.constant dense<0xFF800000> : vector<4xf32>
    %63 = vector.multi_reduction <maximumf>, %62, %cst_4 [0] : vector<16x4xf32> to vector<4xf32>
    %64 = vector.shape_cast %63 : vector<4xf32> to vector<1x4xf32>
    %65 = arith.ori %46, %21 : i1
    %cst_5 = arith.constant 0.000000e+00 : f32
    %66 = vector.broadcast %cst_5 : f32 to vector<1x4xf32>
    %67 = arith.select %65, %66, %64 : vector<1x4xf32>
    %cst_6 = arith.constant 0xFF800000 : f32
    %68 = vector.shape_cast %30 : vector<16x1xi1> to vector<16x1xi1>
    %69 = vector.broadcast %68 : vector<16x1xi1> to vector<16x4xi1>
    %70 = vector.broadcast %cst_6 : f32 to vector<16x4xf32>
    %71 = arith.select %69, %49, %70 : vector<16x4xi1>, vector<16x4xf32>
    %cst_7 = arith.constant dense<0xFF800000> : vector<4xf32>
    %72 = vector.multi_reduction <maximumf>, %71, %cst_7 [0] : vector<16x4xf32> to vector<4xf32>
    %73 = vector.shape_cast %72 : vector<4xf32> to vector<1x4xf32>
    %74 = arith.ori %46, %31 : i1
    %cst_8 = arith.constant 0.000000e+00 : f32
    %75 = vector.broadcast %cst_8 : f32 to vector<1x4xf32>
    %76 = arith.select %74, %75, %73 : vector<1x4xf32>
    %cst_9 = arith.constant 0xFF800000 : f32
    %77 = vector.shape_cast %40 : vector<16x1xi1> to vector<16x1xi1>
    %78 = vector.broadcast %77 : vector<16x1xi1> to vector<16x4xi1>
    %79 = vector.broadcast %cst_9 : f32 to vector<16x4xf32>
    %80 = arith.select %78, %49, %79 : vector<16x4xi1>, vector<16x4xf32>
    %cst_10 = arith.constant dense<0xFF800000> : vector<4xf32>
    %81 = vector.multi_reduction <maximumf>, %80, %cst_10 [0] : vector<16x4xf32> to vector<4xf32>
    %82 = vector.shape_cast %81 : vector<4xf32> to vector<1x4xf32>
    %83 = arith.ori %46, %41 : i1
    %cst_11 = arith.constant 0.000000e+00 : f32
    %84 = vector.broadcast %cst_11 : f32 to vector<1x4xf32>
    %85 = arith.select %83, %84, %82 : vector<1x4xf32>
    %86 = tpu.concatenate %58, %67, %76, %85 in 0 : vector<1x4xf32>, vector<1x4xf32>, vector<1x4xf32>, vector<1x4xf32> -> vector<4x4xf32>
    %87 = vector.shape_cast %86 : vector<4x4xf32> to vector<1x4x4xf32>
    %c2 = arith.constant 2 : index
    %88 = arith.index_cast %arg1 : i32 to index
    %89 = memref.load %arg2[%c2, %88] : memref<17x6xi32, #tpu.memory_space<smem>>
    %c6 = arith.constant 6 : index
    %90 = arith.index_cast %arg1 : i32 to index
    %91 = memref.load %arg2[%c6, %90] : memref<17x6xi32, #tpu.memory_space<smem>>
    %92 = arith.cmpi sle, %91, %89 : i32
    %93 = arith.subi %91, %89 : i32
    %94 = arith.addi %89, %93 : i32
    %c1_i32_12 = arith.constant 1 : i32
    %95 = scf.for %arg5 = %89 to %94 step %c1_i32_12 iter_args(%arg6 = %0) -> (vector<16x4xf32>)  : i32 {
      %c0_54 = arith.constant 0 : index
      %230 = arith.index_cast %arg5 : i32 to index
      %c0_55 = arith.constant 0 : index
      %c0_56 = arith.constant 0 : index
      %231 = vector.load %arg3[%c0_54, %230, %c0_55, %c0_56] : memref<1x16x16x4xf32, #tpu.memory_space<vmem>>, vector<1x1x16x4xf32>
      %232 = vector.shape_cast %231 : vector<1x1x16x4xf32> to vector<16x4xf32>
      %233 = arith.maximumf %arg6, %232 : vector<16x4xf32>
      scf.yield %233 : vector<16x4xf32>
    }
    %cst_13 = arith.constant 0xFF800000 : f32
    %96 = vector.shape_cast %10 : vector<16x1xi1> to vector<16x1xi1>
    %97 = vector.broadcast %96 : vector<16x1xi1> to vector<16x4xi1>
    %98 = vector.broadcast %cst_13 : f32 to vector<16x4xf32>
    %99 = arith.select %97, %95, %98 : vector<16x4xi1>, vector<16x4xf32>
    %cst_14 = arith.constant dense<0xFF800000> : vector<4xf32>
    %100 = vector.multi_reduction <maximumf>, %99, %cst_14 [0] : vector<16x4xf32> to vector<4xf32>
    %101 = vector.shape_cast %100 : vector<4xf32> to vector<1x4xf32>
    %102 = arith.ori %92, %11 : i1
    %cst_15 = arith.constant 0.000000e+00 : f32
    %103 = vector.broadcast %cst_15 : f32 to vector<1x4xf32>
    %104 = arith.select %102, %103, %101 : vector<1x4xf32>
    %cst_16 = arith.constant 0xFF800000 : f32
    %105 = vector.shape_cast %20 : vector<16x1xi1> to vector<16x1xi1>
    %106 = vector.broadcast %105 : vector<16x1xi1> to vector<16x4xi1>
    %107 = vector.broadcast %cst_16 : f32 to vector<16x4xf32>
    %108 = arith.select %106, %95, %107 : vector<16x4xi1>, vector<16x4xf32>
    %cst_17 = arith.constant dense<0xFF800000> : vector<4xf32>
    %109 = vector.multi_reduction <maximumf>, %108, %cst_17 [0] : vector<16x4xf32> to vector<4xf32>
    %110 = vector.shape_cast %109 : vector<4xf32> to vector<1x4xf32>
    %111 = arith.ori %92, %21 : i1
    %cst_18 = arith.constant 0.000000e+00 : f32
    %112 = vector.broadcast %cst_18 : f32 to vector<1x4xf32>
    %113 = arith.select %111, %112, %110 : vector<1x4xf32>
    %cst_19 = arith.constant 0xFF800000 : f32
    %114 = vector.shape_cast %30 : vector<16x1xi1> to vector<16x1xi1>
    %115 = vector.broadcast %114 : vector<16x1xi1> to vector<16x4xi1>
    %116 = vector.broadcast %cst_19 : f32 to vector<16x4xf32>
    %117 = arith.select %115, %95, %116 : vector<16x4xi1>, vector<16x4xf32>
    %cst_20 = arith.constant dense<0xFF800000> : vector<4xf32>
    %118 = vector.multi_reduction <maximumf>, %117, %cst_20 [0] : vector<16x4xf32> to vector<4xf32>
    %119 = vector.shape_cast %118 : vector<4xf32> to vector<1x4xf32>
    %120 = arith.ori %92, %31 : i1
    %cst_21 = arith.constant 0.000000e+00 : f32
    %121 = vector.broadcast %cst_21 : f32 to vector<1x4xf32>
    %122 = arith.select %120, %121, %119 : vector<1x4xf32>
    %cst_22 = arith.constant 0xFF800000 : f32
    %123 = vector.shape_cast %40 : vector<16x1xi1> to vector<16x1xi1>
    %124 = vector.broadcast %123 : vector<16x1xi1> to vector<16x4xi1>
    %125 = vector.broadcast %cst_22 : f32 to vector<16x4xf32>
    %126 = arith.select %124, %95, %125 : vector<16x4xi1>, vector<16x4xf32>
    %cst_23 = arith.constant dense<0xFF800000> : vector<4xf32>
    %127 = vector.multi_reduction <maximumf>, %126, %cst_23 [0] : vector<16x4xf32> to vector<4xf32>
    %128 = vector.shape_cast %127 : vector<4xf32> to vector<1x4xf32>
    %129 = arith.ori %92, %41 : i1
    %cst_24 = arith.constant 0.000000e+00 : f32
    %130 = vector.broadcast %cst_24 : f32 to vector<1x4xf32>
    %131 = arith.select %129, %130, %128 : vector<1x4xf32>
    %132 = tpu.concatenate %104, %113, %122, %131 in 0 : vector<1x4xf32>, vector<1x4xf32>, vector<1x4xf32>, vector<1x4xf32> -> vector<4x4xf32>
    %133 = vector.shape_cast %132 : vector<4x4xf32> to vector<1x4x4xf32>
    %c3 = arith.constant 3 : index
    %134 = arith.index_cast %arg1 : i32 to index
    %135 = memref.load %arg2[%c3, %134] : memref<17x6xi32, #tpu.memory_space<smem>>
    %c7 = arith.constant 7 : index
    %136 = arith.index_cast %arg1 : i32 to index
    %137 = memref.load %arg2[%c7, %136] : memref<17x6xi32, #tpu.memory_space<smem>>
    %138 = arith.cmpi sle, %137, %135 : i32
    %139 = arith.subi %137, %135 : i32
    %140 = arith.addi %135, %139 : i32
    %c1_i32_25 = arith.constant 1 : i32
    %141 = scf.for %arg5 = %135 to %140 step %c1_i32_25 iter_args(%arg6 = %0) -> (vector<16x4xf32>)  : i32 {
      %c0_54 = arith.constant 0 : index
      %230 = arith.index_cast %arg5 : i32 to index
      %c0_55 = arith.constant 0 : index
      %c0_56 = arith.constant 0 : index
      %231 = vector.load %arg3[%c0_54, %230, %c0_55, %c0_56] : memref<1x16x16x4xf32, #tpu.memory_space<vmem>>, vector<1x1x16x4xf32>
      %232 = vector.shape_cast %231 : vector<1x1x16x4xf32> to vector<16x4xf32>
      %233 = arith.maximumf %arg6, %232 : vector<16x4xf32>
      scf.yield %233 : vector<16x4xf32>
    }
    %cst_26 = arith.constant 0xFF800000 : f32
    %142 = vector.shape_cast %10 : vector<16x1xi1> to vector<16x1xi1>
    %143 = vector.broadcast %142 : vector<16x1xi1> to vector<16x4xi1>
    %144 = vector.broadcast %cst_26 : f32 to vector<16x4xf32>
    %145 = arith.select %143, %141, %144 : vector<16x4xi1>, vector<16x4xf32>
    %cst_27 = arith.constant dense<0xFF800000> : vector<4xf32>
    %146 = vector.multi_reduction <maximumf>, %145, %cst_27 [0] : vector<16x4xf32> to vector<4xf32>
    %147 = vector.shape_cast %146 : vector<4xf32> to vector<1x4xf32>
    %148 = arith.ori %138, %11 : i1
    %cst_28 = arith.constant 0.000000e+00 : f32
    %149 = vector.broadcast %cst_28 : f32 to vector<1x4xf32>
    %150 = arith.select %148, %149, %147 : vector<1x4xf32>
    %cst_29 = arith.constant 0xFF800000 : f32
    %151 = vector.shape_cast %20 : vector<16x1xi1> to vector<16x1xi1>
    %152 = vector.broadcast %151 : vector<16x1xi1> to vector<16x4xi1>
    %153 = vector.broadcast %cst_29 : f32 to vector<16x4xf32>
    %154 = arith.select %152, %141, %153 : vector<16x4xi1>, vector<16x4xf32>
    %cst_30 = arith.constant dense<0xFF800000> : vector<4xf32>
    %155 = vector.multi_reduction <maximumf>, %154, %cst_30 [0] : vector<16x4xf32> to vector<4xf32>
    %156 = vector.shape_cast %155 : vector<4xf32> to vector<1x4xf32>
    %157 = arith.ori %138, %21 : i1
    %cst_31 = arith.constant 0.000000e+00 : f32
    %158 = vector.broadcast %cst_31 : f32 to vector<1x4xf32>
    %159 = arith.select %157, %158, %156 : vector<1x4xf32>
    %cst_32 = arith.constant 0xFF800000 : f32
    %160 = vector.shape_cast %30 : vector<16x1xi1> to vector<16x1xi1>
    %161 = vector.broadcast %160 : vector<16x1xi1> to vector<16x4xi1>
    %162 = vector.broadcast %cst_32 : f32 to vector<16x4xf32>
    %163 = arith.select %161, %141, %162 : vector<16x4xi1>, vector<16x4xf32>
    %cst_33 = arith.constant dense<0xFF800000> : vector<4xf32>
    %164 = vector.multi_reduction <maximumf>, %163, %cst_33 [0] : vector<16x4xf32> to vector<4xf32>
    %165 = vector.shape_cast %164 : vector<4xf32> to vector<1x4xf32>
    %166 = arith.ori %138, %31 : i1
    %cst_34 = arith.constant 0.000000e+00 : f32
    %167 = vector.broadcast %cst_34 : f32 to vector<1x4xf32>
    %168 = arith.select %166, %167, %165 : vector<1x4xf32>
    %cst_35 = arith.constant 0xFF800000 : f32
    %169 = vector.shape_cast %40 : vector<16x1xi1> to vector<16x1xi1>
    %170 = vector.broadcast %169 : vector<16x1xi1> to vector<16x4xi1>
    %171 = vector.broadcast %cst_35 : f32 to vector<16x4xf32>
    %172 = arith.select %170, %141, %171 : vector<16x4xi1>, vector<16x4xf32>
    %cst_36 = arith.constant dense<0xFF800000> : vector<4xf32>
    %173 = vector.multi_reduction <maximumf>, %172, %cst_36 [0] : vector<16x4xf32> to vector<4xf32>
    %174 = vector.shape_cast %173 : vector<4xf32> to vector<1x4xf32>
    %175 = arith.ori %138, %41 : i1
    %cst_37 = arith.constant 0.000000e+00 : f32
    %176 = vector.broadcast %cst_37 : f32 to vector<1x4xf32>
    %177 = arith.select %175, %176, %174 : vector<1x4xf32>
    %178 = tpu.concatenate %150, %159, %168, %177 in 0 : vector<1x4xf32>, vector<1x4xf32>, vector<1x4xf32>, vector<1x4xf32> -> vector<4x4xf32>
    %179 = vector.shape_cast %178 : vector<4x4xf32> to vector<1x4x4xf32>
    %c4 = arith.constant 4 : index
    %180 = arith.index_cast %arg1 : i32 to index
    %181 = memref.load %arg2[%c4, %180] : memref<17x6xi32, #tpu.memory_space<smem>>
    %c8 = arith.constant 8 : index
    %182 = arith.index_cast %arg1 : i32 to index
    %183 = memref.load %arg2[%c8, %182] : memref<17x6xi32, #tpu.memory_space<smem>>
    %184 = arith.cmpi sle, %183, %181 : i32
    %185 = arith.subi %183, %181 : i32
    %186 = arith.addi %181, %185 : i32
    %c1_i32_38 = arith.constant 1 : i32
    %187 = scf.for %arg5 = %181 to %186 step %c1_i32_38 iter_args(%arg6 = %0) -> (vector<16x4xf32>)  : i32 {
      %c0_54 = arith.constant 0 : index
      %230 = arith.index_cast %arg5 : i32 to index
      %c0_55 = arith.constant 0 : index
      %c0_56 = arith.constant 0 : index
      %231 = vector.load %arg3[%c0_54, %230, %c0_55, %c0_56] : memref<1x16x16x4xf32, #tpu.memory_space<vmem>>, vector<1x1x16x4xf32>
      %232 = vector.shape_cast %231 : vector<1x1x16x4xf32> to vector<16x4xf32>
      %233 = arith.maximumf %arg6, %232 : vector<16x4xf32>
      scf.yield %233 : vector<16x4xf32>
    }
    %cst_39 = arith.constant 0xFF800000 : f32
    %188 = vector.shape_cast %10 : vector<16x1xi1> to vector<16x1xi1>
    %189 = vector.broadcast %188 : vector<16x1xi1> to vector<16x4xi1>
    %190 = vector.broadcast %cst_39 : f32 to vector<16x4xf32>
    %191 = arith.select %189, %187, %190 : vector<16x4xi1>, vector<16x4xf32>
    %cst_40 = arith.constant dense<0xFF800000> : vector<4xf32>
    %192 = vector.multi_reduction <maximumf>, %191, %cst_40 [0] : vector<16x4xf32> to vector<4xf32>
    %193 = vector.shape_cast %192 : vector<4xf32> to vector<1x4xf32>
    %194 = arith.ori %184, %11 : i1
    %cst_41 = arith.constant 0.000000e+00 : f32
    %195 = vector.broadcast %cst_41 : f32 to vector<1x4xf32>
    %196 = arith.select %194, %195, %193 : vector<1x4xf32>
    %cst_42 = arith.constant 0xFF800000 : f32
    %197 = vector.shape_cast %20 : vector<16x1xi1> to vector<16x1xi1>
    %198 = vector.broadcast %197 : vector<16x1xi1> to vector<16x4xi1>
    %199 = vector.broadcast %cst_42 : f32 to vector<16x4xf32>
    %200 = arith.select %198, %187, %199 : vector<16x4xi1>, vector<16x4xf32>
    %cst_43 = arith.constant dense<0xFF800000> : vector<4xf32>
    %201 = vector.multi_reduction <maximumf>, %200, %cst_43 [0] : vector<16x4xf32> to vector<4xf32>
    %202 = vector.shape_cast %201 : vector<4xf32> to vector<1x4xf32>
    %203 = arith.ori %184, %21 : i1
    %cst_44 = arith.constant 0.000000e+00 : f32
    %204 = vector.broadcast %cst_44 : f32 to vector<1x4xf32>
    %205 = arith.select %203, %204, %202 : vector<1x4xf32>
    %cst_45 = arith.constant 0xFF800000 : f32
    %206 = vector.shape_cast %30 : vector<16x1xi1> to vector<16x1xi1>
    %207 = vector.broadcast %206 : vector<16x1xi1> to vector<16x4xi1>
    %208 = vector.broadcast %cst_45 : f32 to vector<16x4xf32>
    %209 = arith.select %207, %187, %208 : vector<16x4xi1>, vector<16x4xf32>
    %cst_46 = arith.constant dense<0xFF800000> : vector<4xf32>
    %210 = vector.multi_reduction <maximumf>, %209, %cst_46 [0] : vector<16x4xf32> to vector<4xf32>
    %211 = vector.shape_cast %210 : vector<4xf32> to vector<1x4xf32>
    %212 = arith.ori %184, %31 : i1
    %cst_47 = arith.constant 0.000000e+00 : f32
    %213 = vector.broadcast %cst_47 : f32 to vector<1x4xf32>
    %214 = arith.select %212, %213, %211 : vector<1x4xf32>
    %cst_48 = arith.constant 0xFF800000 : f32
    %215 = vector.shape_cast %40 : vector<16x1xi1> to vector<16x1xi1>
    %216 = vector.broadcast %215 : vector<16x1xi1> to vector<16x4xi1>
    %217 = vector.broadcast %cst_48 : f32 to vector<16x4xf32>
    %218 = arith.select %216, %187, %217 : vector<16x4xi1>, vector<16x4xf32>
    %cst_49 = arith.constant dense<0xFF800000> : vector<4xf32>
    %219 = vector.multi_reduction <maximumf>, %218, %cst_49 [0] : vector<16x4xf32> to vector<4xf32>
    %220 = vector.shape_cast %219 : vector<4xf32> to vector<1x4xf32>
    %221 = arith.ori %184, %41 : i1
    %cst_50 = arith.constant 0.000000e+00 : f32
    %222 = vector.broadcast %cst_50 : f32 to vector<1x4xf32>
    %223 = arith.select %221, %222, %220 : vector<1x4xf32>
    %224 = tpu.concatenate %196, %205, %214, %223 in 0 : vector<1x4xf32>, vector<1x4xf32>, vector<1x4xf32>, vector<1x4xf32> -> vector<4x4xf32>
    %225 = vector.shape_cast %224 : vector<4x4xf32> to vector<1x4x4xf32>
    %226 = tpu.concatenate %87, %133, %179, %225 in 0 : vector<1x4x4xf32>, vector<1x4x4xf32>, vector<1x4x4xf32>, vector<1x4x4xf32> -> vector<4x4x4xf32>
    %c0 = arith.constant 0 : index
    %c0_51 = arith.constant 0 : index
    %c0_52 = arith.constant 0 : index
    %c0_53 = arith.constant 0 : index
    %227 = vector.load %arg4[%c0, %c0_51, %c0_52, %c0_53] : memref<1x4x4x4xf32, #tpu.memory_space<vmem>>, vector<1x4x4x4xf32>
    %228 = vector.shape_cast %227 : vector<1x4x4x4xf32> to vector<4x4x4xf32>
    %229 = vector.shape_cast %226 : vector<4x4x4xf32> to vector<1x4x4x4xf32>
    tpu.vector_store %arg4[%c0, %c0_51, %c0_52, %c0_53], %229 {strides = array<i32>} : memref<1x4x4x4xf32, #tpu.memory_space<vmem>>, vector<1x4x4x4xf32>,
    return
  }
  func.func @transform_0(%arg0: i32, %arg1: i32, %arg2: memref<17x6xi32, #tpu.memory_space<smem>>) -> (i32, i32, i32, i32) {
    %c0 = arith.constant 0 : index
    %0 = arith.index_cast %arg1 : i32 to index
    %1 = memref.load %arg2[%c0, %0] : memref<17x6xi32, #tpu.memory_space<smem>>
    %c0_i32 = arith.constant 0 : i32
    %c0_i32_0 = arith.constant 0 : i32
    %c0_i32_1 = arith.constant 0 : i32
    return %1, %c0_i32, %c0_i32_0, %arg0 : i32, i32, i32, i32
  }
  func.func @transform_1(%arg0: i32, %arg1: i32, %arg2: memref<17x6xi32, #tpu.memory_space<smem>>) -> (i32, i32, i32, i32) {
    %c0_i32 = arith.constant 0 : i32
    %c0_i32_0 = arith.constant 0 : i32
    %c0_i32_1 = arith.constant 0 : i32
    return %arg1, %c0_i32, %c0_i32_0, %arg0 : i32, i32, i32, i32
  }
}

</mosaic_0001>

<llo_original>
// kernel: tpu_custom_call.1
$region0: #{tpu_custom_call.1}
  #allocation0 [shape = 'u32[]', space=smem, size = 0x4, offset = 0x4, fixed_abs, tag = 'smem constant byte address 0x4 - core index']
  #allocation1 [shape = 'u32[144,128]{1,0:T(1,128)}', space=vmem, size = 0x12000, scoped, tag = 'internal scratch']
  #allocation2 [shape = 's32[1]{0}', space=sflag, size = 0x4, scoped, tag = 'scoped memory for tpu_custom_call.1']
  #allocation3 [shape = 'u8[12288]{0}', space=smem, size = 0x3000, scoped, tag = 'prefetched SMEM operand 0']
  %s0 = inlined_call_operand.vmem [shape: s32[17,6], index: 0, kind: input, shape index: {}]
  %s1 = inlined_call_operand.vmem [shape: f32[2,16,16,4], index: 1, kind: input, shape index: {}]
  %s2 = inlined_call_operand.vmem [shape: f32[6,4,4,4], index: 2, kind: output, shape index: {}]
  %s3 = sld [smem:[#allocation0]]
  $region65: #{tpu_custom_call.1} parent=0
    _
  %s5 = ssub.s32 1, %s3
  %s6 = scalar_select 0, %s5, %s3
  %s7 = sshll.u32 %s0, 4
  %s8 = int_to_ptr.vmem [resolvable:$true] %s7
  %10 = dma.vmem_to_smem %s8, 384, [#allocation3], [#allocation2]
  %11 = dma.done [#allocation2], 384
  %12 = sfence
  loop: start=0, step=1, limit=8
  $region2: #{tpu_custom_call.1} parent=0 // loop_pre_header
    _
  $region3: #{tpu_custom_call.1} parent=0 // loop_header
    %s14 = sphi 0, %s18
    %p15 = scmp.ge.s32.totalorder %s14, 8
    %s21 = sphi 0, %s33
    %s22 = sphi 0, %s29
    %s23 = sphi 0, %s21
    %s24 = sphi 0, %s22
    %s25 = sphi 0, %s23
    %s26 = sphi 0, %s24
    %s40 = sphi 0, %s42
    %s43 = sphi 0, %s40
    %s44 = sphi 0, %s43
    %s60 = sphi 0, %s44
    %s68 = sphi 0, %s70
    %s71 = sphi 0, %s68
    %s72 = sphi 0, %s71
    %s88 = sphi 0, %s72
  $region4: #{tpu_custom_call.1} parent=0 // loop_header_branch
    %17 = sbr.rel (%p15) target = $region8
  $region5: #{tpu_custom_call.1} parent=0 // loop_body
    %s19 = ssub.s32 %s14, 1
    %s20 = ssub.s32 %s14, 2
    %s27 = sadd.s32 1, %s22
    %p28 = scmp.ge.s32.totalorder %s27, 6
    %s29 = scalar_select %p28, 0, %s27
    %s30 = sadd.s32 1, %s21
    %s31 = scalar_select %p28, %s30, %s21
    %p32 = scmp.ge.s32.totalorder %s31, 1
    %s33 = scalar_select %p32, 0, %s31
    %s34 = sld [smem:[#allocation3 + %s22]]
    %s35 = sld [smem:[#allocation3 + %s29]]
    %s36 = ssub.s32 %s34, %s35
    %s37 = ssub.s32 %s21, %s33
    %s38 = sor.u32 %s36, %s37
    %p39 = scmp.eq.s32.totalorder %s38, 0
    %s41 = sadd.s32 %s40, 1
    %s42 = scalar_select %p39, %s40, %s41
    %p45 = pneg %p39
    %p46 = scmp.eq.s32.totalorder %s14, 5
    %p47 = por %p45, %p46
    %p48 = scmp.ne.s32.totalorder %s40, %s43
    %p49 = scmp.eq.s32.totalorder %s14, 0
    %p50 = por %p48, %p49
    %p51 = scmp.ne.s32.totalorder %s40, %s43
    %p52 = scmp.eq.s32.totalorder %s19, 5
    %p53 = por %p51, %p52
    %p54 = scmp.ne.s32.totalorder %s43, %s44
    %p55 = scmp.eq.s32.totalorder %s19, 0
    %p56 = por %p54, %p55
    %p57 = scmp.ne.s32.totalorder %s43, %s44
    %p58 = scmp.eq.s32.totalorder %s20, 5
    %p59 = por %p57, %p58
    %p61 = scmp.ne.s32.totalorder %s44, %s60
    %p62 = scmp.eq.s32.totalorder %s20, 0
    %p63 = por %p61, %p62
    %s64 = ssub.s32 %s22, %s29
    %s65 = ssub.s32 %s21, %s33
    %s66 = sor.u32 %s64, %s65
    %p67 = scmp.eq.s32.totalorder %s66, 0
    %s69 = sadd.s32 %s68, 1
    %s70 = scalar_select %p67, %s68, %s69
    %p73 = pneg %p67
    %p74 = scmp.eq.s32.totalorder %s14, 5
    %p75 = por %p73, %p74
    %p76 = scmp.ne.s32.totalorder %s68, %s71
    %p77 = scmp.eq.s32.totalorder %s14, 0
    %p78 = por %p76, %p77
    %p79 = scmp.ne.s32.totalorder %s68, %s71
    %p80 = scmp.eq.s32.totalorder %s19, 5
    %p81 = por %p79, %p80
    %p82 = scmp.ne.s32.totalorder %s71, %s72
    %p83 = scmp.eq.s32.totalorder %s19, 0
    %p84 = por %p82, %p83
    %p85 = scmp.ne.s32.totalorder %s71, %s72
    %p86 = scmp.eq.s32.totalorder %s20, 5
    %p87 = por %p85, %p86
    %p89 = scmp.ne.s32.totalorder %s72, %s88
    %p90 = scmp.eq.s32.totalorder %s20, 0
    %p91 = por %p89, %p90
    %p92 = scmp.le.s32.totalorder 1, %s14
    %p93 = scmp.lt.s32.totalorder %s14, 7
    %p94 = pnand %p92, %p93
    %p95 = pneg %p94
    // Predicated region
    $region9: #{tpu_custom_call.1} parent=5 // pred_check
      _
    $region10: #{tpu_custom_call.1} parent=5 // pred_check_branch
      %97 = sbr.rel (%p94) target = $region12
    $region11: #{tpu_custom_call.1} parent=5 // pred_region
      %s98 = ssub.s32 %s14, 1
    $region12: #{tpu_custom_call.1} parent=5 // pred_fallthru
      _
    %p99 = scmp.lt.s32.totalorder %s14, 6
    // Predicated region
    $region13: #{tpu_custom_call.1} parent=5 // pred_check
      %p100 = pneg %p99
    $region14: #{tpu_custom_call.1} parent=5 // pred_check_branch
      %102 = sbr.rel (%p100) target = $region16
    $region15: #{tpu_custom_call.1} parent=5 // pred_region
      // Predicated region
      $region17: #{tpu_custom_call.1} parent=15 // pred_check
        %p103 = pneg %p50
      $region18: #{tpu_custom_call.1} parent=15 // pred_check_branch
        %105 = sbr.rel (%p103) target = $region20
      $region19: #{tpu_custom_call.1} parent=15 // pred_region
        %s106 = sld [smem:[#allocation3 + %s22]]
        %p107 = scmp.lt.s32.totalorder %s106, 1
        %s108 = scalar_select %p107, %s106, 1
        %p109 = scmp.lt.s32.totalorder %s21, 0
        %s110 = scalar_select %p109, %s21, 0
        %s111 = smul.addr %s108, 32
        %s112 = sadd.s32 %s110, %s111
        %s113 = smul.addr %s112, 8
        %s114 = scalar_lea.vmem %s1, %s113
        %s115 = sld [smem:[#allocation3 + %s22]]
      $region20: #{tpu_custom_call.1} parent=15 // pred_fallthru
        _
    $region16: #{tpu_custom_call.1} parent=5 // pred_fallthru
      _
    %p116 = scmp.le.s32.totalorder 1, %s14
    %p117 = scmp.lt.s32.totalorder %s14, 7
    %p118 = pnand %p116, %p117
    %p119 = pneg %p118
    // Predicated region
    $region21: #{tpu_custom_call.1} parent=5 // pred_check
      _
    $region22: #{tpu_custom_call.1} parent=5 // pred_check_branch
      %121 = sbr.rel (%p118) target = $region24
    $region23: #{tpu_custom_call.1} parent=5 // pred_region
      %s122 = ssub.s32 %s14, 1
      %s123 = sld [smem:[#allocation3 + %s24]]
      %p124 = scmp.lt.s32.totalorder %s123, 1
      %s125 = scalar_select %p124, %s123, 1
      %p126 = scmp.lt.s32.totalorder %s23, 0
      %s127 = scalar_select %p126, %s23, 0
      %s128 = smul.addr %s125, 32
      %s129 = sadd.s32 %s127, %s128
      %s130 = smul.addr %s129, 8
      %s131 = scalar_lea.vmem %s1, %s130
      %p132 = pneg %p56
      %p133 = pneg %p53
      %p134 = pneg %p84
      %p135 = pneg %p81
      %p136 = scmp.lt.s32.totalorder %s24, 5
      %s137 = scalar_select %p136, %s24, 5
      %p138 = scmp.lt.s32.totalorder %s23, 0
      %s139 = scalar_select %p138, %s23, 0
      %s140 = smul.addr %s137, 4
      %s141 = sadd.s32 %s139, %s140
      %s142 = smul.addr %s141, 4
      %s143 = scalar_lea.vmem %s2, %s142
      %s144 = sld [smem:[#allocation3 + %s24]]
      %p145 = scmp.lt.s32.totalorder %s144, 1
      %s146 = scalar_select %p145, %s144, 1
      %p147 = scmp.lt.s32.totalorder %s23, 0
      %s148 = scalar_select %p147, %s23, 0
      %s149 = smul.addr %s146, 32
      %s150 = sadd.s32 %s148, %s149
      %s151 = smul.addr %s150, 8
      %s152 = scalar_lea.vmem %s1, %s151
      %s153 = sld [smem:[#allocation3 + %s24]]
      %p154 = scmp.lt.s32.totalorder %s24, 5
      %s155 = scalar_select %p154, %s24, 5
      %p156 = scmp.lt.s32.totalorder %s23, 0
      %s157 = scalar_select %p156, %s23, 0
      %s158 = smul.addr %s155, 4
      %s159 = sadd.s32 %s157, %s158
      %s160 = smul.addr %s159, 4
      %s161 = scalar_lea.vmem %s2, %s160
      %v162 = vlaneseq
      %v163 = vshrl.u32 %v162, 7
      %v164 = vadd.s32 %v163, 8
      %s165 = sshra.s32 %s24, 7
      %s166 = sand.u32 %s24, 127
      %s167 = sadd.s32 %s165, 9
      %s168 = smul.u32 %s167, 128
      %s169 = sshra.s32 %s24, 7
      %s170 = sand.u32 %s24, 127
      %s171 = sadd.s32 %s168, %s170
      %s172 = sld [smem:[#allocation3 + %s171]]
      %s173 = sadd.s32 %s165, 13
      %s174 = smul.u32 %s173, 128
      %s175 = sadd.s32 %s174, %s170
      %s176 = sld [smem:[#allocation3 + %s175]]
      %v177 = vstv %s172
      %vm178 = vcmp.ge.s32.totalorder %v163, %v177
      %vm179 = vcmp.ge.s32.totalorder %v164, %v177
      %v180 = vstv %s176
      %vm181 = vcmp.lt.s32.totalorder %v163, %v180
      %vm182 = vcmp.lt.s32.totalorder %v164, %v180
      %vm183 = vmand %vm178, %vm181
      %vm184 = vmand %vm179, %vm182
      %p185 = scmp.le.s32.totalorder %s176, %s172
      %s186 = sadd.s32 %s165, 10
      %s187 = smul.u32 %s186, 128
      %s188 = sadd.s32 %s187, %s170
      %s189 = sld [smem:[#allocation3 + %s188]]
      %s190 = sadd.s32 %s165, 14
      %s191 = smul.u32 %s190, 128
      %s192 = sadd.s32 %s191, %s170
      %s193 = sld [smem:[#allocation3 + %s192]]
      %v194 = vstv %s189
      %vm195 = vcmp.ge.s32.totalorder %v163, %v194
      %vm196 = vcmp.ge.s32.totalorder %v164, %v194
      %v197 = vstv %s193
      %vm198 = vcmp.lt.s32.totalorder %v163, %v197
      %vm199 = vcmp.lt.s32.totalorder %v164, %v197
      %vm200 = vmand %vm195, %vm198
      %vm201 = vmand %vm196, %vm199
      %p202 = scmp.le.s32.totalorder %s193, %s189
      %s203 = sadd.s32 %s165, 11
      %s204 = smul.u32 %s203, 128
      %s205 = sadd.s32 %s204, %s170
      %s206 = sld [smem:[#allocation3 + %s205]]
      %s207 = sadd.s32 %s165, 15
      %s208 = smul.u32 %s207, 128
      %s209 = sadd.s32 %s208, %s170
      %s210 = sld [smem:[#allocation3 + %s209]]
      %v211 = vstv %s206
      %vm212 = vcmp.ge.s32.totalorder %v163, %v211
      %vm213 = vcmp.ge.s32.totalorder %v164, %v211
      %v214 = vstv %s210
      %vm215 = vcmp.lt.s32.totalorder %v163, %v214
      %vm216 = vcmp.lt.s32.totalorder %v164, %v214
      %vm217 = vmand %vm212, %vm215
      %vm218 = vmand %vm213, %vm216
      %p219 = scmp.le.s32.totalorder %s210, %s206
      %s220 = sadd.s32 %s165, 12
      %s221 = smul.u32 %s220, 128
      %s222 = sadd.s32 %s221, %s170
      %s223 = sld [smem:[#allocation3 + %s222]]
      %s224 = sadd.s32 %s165, 16
      %s225 = smul.u32 %s224, 128
      %s226 = sadd.s32 %s225, %s170
      %s227 = sld [smem:[#allocation3 + %s226]]
      %v228 = vstv %s223
      %vm229 = vcmp.ge.s32.totalorder %v163, %v228
      %vm230 = vcmp.ge.s32.totalorder %v164, %v228
      %v231 = vstv %s227
      %vm232 = vcmp.lt.s32.totalorder %v163, %v231
      %vm233 = vcmp.lt.s32.totalorder %v164, %v231
      %vm234 = vmand %vm229, %vm232
      %vm235 = vmand %vm230, %vm233
      %p236 = scmp.le.s32.totalorder %s227, %s223
      %s237 = sadd.s32 %s165, 1
      %s238 = smul.u32 %s237, 128
      %s239 = sadd.s32 %s238, %s170
      %s240 = sld [smem:[#allocation3 + %s239]]
      %s241 = sadd.s32 %s165, 5
      %s242 = smul.u32 %s241, 128
      %s243 = sadd.s32 %s242, %s170
      %s244 = sld [smem:[#allocation3 + %s243]]
      %p245 = scmp.le.s32.totalorder %s244, %s240
      // While loop
      $region25: #{tpu_custom_call.1} parent=23 // loop_pre_header
        _
      $region26: #{tpu_custom_call.1} parent=23 // loop_header
        %s247 = sphi %s240, %s249
        %p248 = scmp.ge.s32.totalorder %s247, %s244
        %v252 = vphi -inf, %v258
        %v253 = vphi -inf, %v259
      $region27: #{tpu_custom_call.1} parent=23 // loop_header_branch
        %251 = sbr.rel (%p248) target = $region31
      $region28: #{tpu_custom_call.1} parent=23 // loop_body
        %s254 = smul.u32 %s247, 16
        %s255 = scalar_lea.vmem %s152, %s254
        %v256 = vld [vmem:[%s255] sm:$0xff]
        %v257 = vld [vmem:[%s255 + $0x8] sm:$0xff]
        %v258 = vmax.f32 %v252, %v256
        %v259 = vmax.f32 %v253, %v257
      $region29: #{tpu_custom_call.1} parent=23 // loop_footer
        %s249 = sadd.s32 %s247, 1
      $region30: #{tpu_custom_call.1} parent=23 // loop_footer_branch
        %246 = sbr.rel target = $region26
      $region31: #{tpu_custom_call.1} parent=23 // loop_exit
        _
      %v260 = vsel %vm183, 1, 0
      %v261 = vsel %vm184, 1, 0
      %vm262 = vcmp.eq.s32.totalorder %v260, 1
      %vm263 = vcmp.eq.s32.totalorder %v261, 1
      %v264 = vsel %vm262, %v252, -inf
      %v265 = vsel %vm263, %v253, -inf
      %vm266 = vcmask 31744
      %v267 = vsel %vm266, %v264, -inf
      %v268 = vsel %vm266, %v265, -inf
      %v269 = vmax.f32 %v267, %v268
      %v270 = vrot.slane %v269, 4
      %v271 = vmax.f32 %v269, %v270
      %v272 = vrot.slane %v271, 2
      %v273 = vmax.f32 %v271, %v272
      %v274 = vrot.slane %v273, 1
      %v275 = vmax.f32 %v273, %v274
      %p276 = por %p245, %p185
      %s277 = scalar_select %p276, 1, 0
      %v278 = vstv %s277
      %vm279 = vcmp.eq.s32.totalorder %v278, 1
      %v280 = vsel %vm279, 0.0, %v275
      %v281 = vsel %vm200, 1, 0
      %v282 = vsel %vm201, 1, 0
      %vm283 = vcmp.eq.s32.totalorder %v281, 1
      %vm284 = vcmp.eq.s32.totalorder %v282, 1
      %v285 = vsel %vm283, %v252, -inf
      %v286 = vsel %vm284, %v253, -inf
      %v287 = vsel %vm266, %v285, -inf
      %v288 = vsel %vm266, %v286, -inf
      %v289 = vmax.f32 %v287, %v288
      %v290 = vrot.slane %v289, 4
      %v291 = vmax.f32 %v289, %v290
      %v292 = vrot.slane %v291, 2
      %v293 = vmax.f32 %v291, %v292
      %v294 = vrot.slane %v293, 1
      %v295 = vmax.f32 %v293, %v294
      %p296 = por %p245, %p202
      %s297 = scalar_select %p296, 1, 0
      %v298 = vstv %s297
      %vm299 = vcmp.eq.s32.totalorder %v298, 1
      %v300 = vsel %vm299, 0.0, %v295
      %v301 = vsel %vm217, 1, 0
      %v302 = vsel %vm218, 1, 0
      %vm303 = vcmp.eq.s32.totalorder %v301, 1
      %vm304 = vcmp.eq.s32.totalorder %v302, 1
      %v305 = vsel %vm303, %v252, -inf
      %v306 = vsel %vm304, %v253, -inf
      %v307 = vsel %vm266, %v305, -inf
      %v308 = vsel %vm266, %v306, -inf
      %v309 = vmax.f32 %v307, %v308
      %v310 = vrot.slane %v309, 4
      %v311 = vmax.f32 %v309, %v310
      %v312 = vrot.slane %v311, 2
      %v313 = vmax.f32 %v311, %v312
      %v314 = vrot.slane %v313, 1
      %v315 = vmax.f32 %v313, %v314
      %p316 = por %p245, %p219
      %s317 = scalar_select %p316, 1, 0
      %v318 = vstv %s317
      %vm319 = vcmp.eq.s32.totalorder %v318, 1
      %v320 = vsel %vm319, 0.0, %v315
      %v321 = vsel %vm234, 1, 0
      %v322 = vsel %vm235, 1, 0
      %vm323 = vcmp.eq.s32.totalorder %v321, 1
      %vm324 = vcmp.eq.s32.totalorder %v322, 1
      %v325 = vsel %vm323, %v252, -inf
      %v326 = vsel %vm324, %v253, -inf
      %v327 = vsel %vm266, %v325, -inf
      %v328 = vsel %vm266, %v326, -inf
      %v329 = vmax.f32 %v327, %v328
      %v330 = vrot.slane %v329, 4
      %v331 = vmax.f32 %v329, %v330
      %v332 = vrot.slane %v331, 2
      %v333 = vmax.f32 %v331, %v332
      %v334 = vrot.slane %v333, 1
      %v335 = vmax.f32 %v333, %v334
      %p336 = por %p245, %p236
      %s337 = scalar_select %p336, 1, 0
      %v338 = vstv %s337
      %vm339 = vcmp.eq.s32.totalorder %v338, 1
      %v340 = vsel %vm339, 0.0, %v335
      %vm341 = vcmask 1040384
      %v342 = vsel %vm341, %v280, %v300
      %vm343 = vcmask 1041408
      %v344 = vsel %vm343, %v342, %v320
      %vm345 = vcmask 1042432
      %v346 = vsel %vm345, %v344, %v340
      %s347 = sadd.s32 %s165, 2
      %s348 = smul.u32 %s347, 128
      %s349 = sadd.s32 %s348, %s170
      %s350 = sld [smem:[#allocation3 + %s349]]
      %s351 = sadd.s32 %s165, 6
      %s352 = smul.u32 %s351, 128
      %s353 = sadd.s32 %s352, %s170
      %s354 = sld [smem:[#allocation3 + %s353]]
      %p355 = scmp.le.s32.totalorder %s354, %s350
      // While loop
      $region32: #{tpu_custom_call.1} parent=23 // loop_pre_header
        _
      $region33: #{tpu_custom_call.1} parent=23 // loop_header
        %s357 = sphi %s350, %s359
        %p358 = scmp.ge.s32.totalorder %s357, %s354
        %v362 = vphi -inf, %v368
        %v363 = vphi -inf, %v369
      $region34: #{tpu_custom_call.1} parent=23 // loop_header_branch
        %361 = sbr.rel (%p358) target = $region38
      $region35: #{tpu_custom_call.1} parent=23 // loop_body
        %s364 = smul.u32 %s357, 16
        %s365 = scalar_lea.vmem %s152, %s364
        %v366 = vld [vmem:[%s365] sm:$0xff]
        %v367 = vld [vmem:[%s365 + $0x8] sm:$0xff]
        %v368 = vmax.f32 %v362, %v366
        %v369 = vmax.f32 %v363, %v367
      $region36: #{tpu_custom_call.1} parent=23 // loop_footer
        %s359 = sadd.s32 %s357, 1
      $region37: #{tpu_custom_call.1} parent=23 // loop_footer_branch
        %356 = sbr.rel target = $region33
      $region38: #{tpu_custom_call.1} parent=23 // loop_exit
        _
      %v370 = vsel %vm262, %v362, -inf
      %v371 = vsel %vm263, %v363, -inf
      %v372 = vsel %vm266, %v370, -inf
      %v373 = vsel %vm266, %v371, -inf
      %v374 = vmax.f32 %v372, %v373
      %v375 = vrot.slane %v374, 4
      %v376 = vmax.f32 %v374, %v375
      %v377 = vrot.slane %v376, 2
      %v378 = vmax.f32 %v376, %v377
      %v379 = vrot.slane %v378, 1
      %v380 = vmax.f32 %v378, %v379
      %p381 = por %p355, %p185
      %s382 = scalar_select %p381, 1, 0
      %v383 = vstv %s382
      %vm384 = vcmp.eq.s32.totalorder %v383, 1
      %v385 = vsel %vm384, 0.0, %v380
      %v386 = vsel %vm283, %v362, -inf
      %v387 = vsel %vm284, %v363, -inf
      %v388 = vsel %vm266, %v386, -inf
      %v389 = vsel %vm266, %v387, -inf
      %v390 = vmax.f32 %v388, %v389
      %v391 = vrot.slane %v390, 4
      %v392 = vmax.f32 %v390, %v391
      %v393 = vrot.slane %v392, 2
      %v394 = vmax.f32 %v392, %v393
      %v395 = vrot.slane %v394, 1
      %v396 = vmax.f32 %v394, %v395
      %p397 = por %p355, %p202
      %s398 = scalar_select %p397, 1, 0
      %v399 = vstv %s398
      %vm400 = vcmp.eq.s32.totalorder %v399, 1
      %v401 = vsel %vm400, 0.0, %v396
      %v402 = vsel %vm303, %v362, -inf
      %v403 = vsel %vm304, %v363, -inf
      %v404 = vsel %vm266, %v402, -inf
      %v405 = vsel %vm266, %v403, -inf
      %v406 = vmax.f32 %v404, %v405
      %v407 = vrot.slane %v406, 4
      %v408 = vmax.f32 %v406, %v407
      %v409 = vrot.slane %v408, 2
      %v410 = vmax.f32 %v408, %v409
      %v411 = vrot.slane %v410, 1
      %v412 = vmax.f32 %v410, %v411
      %p413 = por %p355, %p219
      %s414 = scalar_select %p413, 1, 0
      %v415 = vstv %s414
      %vm416 = vcmp.eq.s32.totalorder %v415, 1
      %v417 = vsel %vm416, 0.0, %v412
      %v418 = vsel %vm323, %v362, -inf
      %v419 = vsel %vm324, %v363, -inf
      %v420 = vsel %vm266, %v418, -inf
      %v421 = vsel %vm266, %v419, -inf
      %v422 = vmax.f32 %v420, %v421
      %v423 = vrot.slane %v422, 4
      %v424 = vmax.f32 %v422, %v423
      %v425 = vrot.slane %v424, 2
      %v426 = vmax.f32 %v424, %v425
      %v427 = vrot.slane %v426, 1
      %v428 = vmax.f32 %v426, %v427
      %p429 = por %p355, %p236
      %s430 = scalar_select %p429, 1, 0
      %v431 = vstv %s430
      %vm432 = vcmp.eq.s32.totalorder %v431, 1
      %v433 = vsel %vm432, 0.0, %v428
      %v434 = vsel %vm341, %v385, %v401
      %v435 = vsel %vm343, %v434, %v417
      %v436 = vsel %vm345, %v435, %v433
      %s437 = sadd.s32 %s165, 3
      %s438 = smul.u32 %s437, 128
      %s439 = sadd.s32 %s438, %s170
      %s440 = sld [smem:[#allocation3 + %s439]]
      %s441 = sadd.s32 %s165, 7
      %s442 = smul.u32 %s441, 128
      %s443 = sadd.s32 %s442, %s170
      %s444 = sld [smem:[#allocation3 + %s443]]
      %p445 = scmp.le.s32.totalorder %s444, %s440
      // While loop
      $region39: #{tpu_custom_call.1} parent=23 // loop_pre_header
        _
      $region40: #{tpu_custom_call.1} parent=23 // loop_header
        %s447 = sphi %s440, %s449
        %p448 = scmp.ge.s32.totalorder %s447, %s444
        %v452 = vphi -inf, %v458
        %v453 = vphi -inf, %v459
      $region41: #{tpu_custom_call.1} parent=23 // loop_header_branch
        %451 = sbr.rel (%p448) target = $region45
      $region42: #{tpu_custom_call.1} parent=23 // loop_body
        %s454 = smul.u32 %s447, 16
        %s455 = scalar_lea.vmem %s152, %s454
        %v456 = vld [vmem:[%s455] sm:$0xff]
        %v457 = vld [vmem:[%s455 + $0x8] sm:$0xff]
        %v458 = vmax.f32 %v452, %v456
        %v459 = vmax.f32 %v453, %v457
      $region43: #{tpu_custom_call.1} parent=23 // loop_footer
        %s449 = sadd.s32 %s447, 1
      $region44: #{tpu_custom_call.1} parent=23 // loop_footer_branch
        %446 = sbr.rel target = $region40
      $region45: #{tpu_custom_call.1} parent=23 // loop_exit
        _
      %v460 = vsel %vm262, %v452, -inf
      %v461 = vsel %vm263, %v453, -inf
      %v462 = vsel %vm266, %v460, -inf
      %v463 = vsel %vm266, %v461, -inf
      %v464 = vmax.f32 %v462, %v463
      %v465 = vrot.slane %v464, 4
      %v466 = vmax.f32 %v464, %v465
      %v467 = vrot.slane %v466, 2
      %v468 = vmax.f32 %v466, %v467
      %v469 = vrot.slane %v468, 1
      %v470 = vmax.f32 %v468, %v469
      %p471 = por %p445, %p185
      %s472 = scalar_select %p471, 1, 0
      %v473 = vstv %s472
      %vm474 = vcmp.eq.s32.totalorder %v473, 1
      %v475 = vsel %vm474, 0.0, %v470
      %v476 = vsel %vm283, %v452, -inf
      %v477 = vsel %vm284, %v453, -inf
      %v478 = vsel %vm266, %v476, -inf
      %v479 = vsel %vm266, %v477, -inf
      %v480 = vmax.f32 %v478, %v479
      %v481 = vrot.slane %v480, 4
      %v482 = vmax.f32 %v480, %v481
      %v483 = vrot.slane %v482, 2
      %v484 = vmax.f32 %v482, %v483
      %v485 = vrot.slane %v484, 1
      %v486 = vmax.f32 %v484, %v485
      %p487 = por %p445, %p202
      %s488 = scalar_select %p487, 1, 0
      %v489 = vstv %s488
      %vm490 = vcmp.eq.s32.totalorder %v489, 1
      %v491 = vsel %vm490, 0.0, %v486
      %v492 = vsel %vm303, %v452, -inf
      %v493 = vsel %vm304, %v453, -inf
      %v494 = vsel %vm266, %v492, -inf
      %v495 = vsel %vm266, %v493, -inf
      %v496 = vmax.f32 %v494, %v495
      %v497 = vrot.slane %v496, 4
      %v498 = vmax.f32 %v496, %v497
      %v499 = vrot.slane %v498, 2
      %v500 = vmax.f32 %v498, %v499
      %v501 = vrot.slane %v500, 1
      %v502 = vmax.f32 %v500, %v501
      %p503 = por %p445, %p219
      %s504 = scalar_select %p503, 1, 0
      %v505 = vstv %s504
      %vm506 = vcmp.eq.s32.totalorder %v505, 1
      %v507 = vsel %vm506, 0.0, %v502
      %v508 = vsel %vm323, %v452, -inf
      %v509 = vsel %vm324, %v453, -inf
      %v510 = vsel %vm266, %v508, -inf
      %v511 = vsel %vm266, %v509, -inf
      %v512 = vmax.f32 %v510, %v511
      %v513 = vrot.slane %v512, 4
      %v514 = vmax.f32 %v512, %v513
      %v515 = vrot.slane %v514, 2
      %v516 = vmax.f32 %v514, %v515
      %v517 = vrot.slane %v516, 1
      %v518 = vmax.f32 %v516, %v517
      %p519 = por %p445, %p236
      %s520 = scalar_select %p519, 1, 0
      %v521 = vstv %s520
      %vm522 = vcmp.eq.s32.totalorder %v521, 1
      %v523 = vsel %vm522, 0.0, %v518
      %v524 = vsel %vm341, %v475, %v491
      %v525 = vsel %vm343, %v524, %v507
      %v526 = vsel %vm345, %v525, %v523
      %s527 = sadd.s32 %s165, 4
      %s528 = smul.u32 %s527, 128
      %s529 = sadd.s32 %s528, %s170
      %s530 = sld [smem:[#allocation3 + %s529]]
      %s531 = sadd.s32 %s165, 8
      %s532 = smul.u32 %s531, 128
      %s533 = sadd.s32 %s532, %s170
      %s534 = sld [smem:[#allocation3 + %s533]]
      %p535 = scmp.le.s32.totalorder %s534, %s530
      // While loop
      $region46: #{tpu_custom_call.1} parent=23 // loop_pre_header
        _
      $region47: #{tpu_custom_call.1} parent=23 // loop_header
        %s537 = sphi %s530, %s539
        %p538 = scmp.ge.s32.totalorder %s537, %s534
        %v542 = vphi -inf, %v548
        %v543 = vphi -inf, %v549
      $region48: #{tpu_custom_call.1} parent=23 // loop_header_branch
        %541 = sbr.rel (%p538) target = $region52
      $region49: #{tpu_custom_call.1} parent=23 // loop_body
        %s544 = smul.u32 %s537, 16
        %s545 = scalar_lea.vmem %s152, %s544
        %v546 = vld [vmem:[%s545] sm:$0xff]
        %v547 = vld [vmem:[%s545 + $0x8] sm:$0xff]
        %v548 = vmax.f32 %v542, %v546
        %v549 = vmax.f32 %v543, %v547
      $region50: #{tpu_custom_call.1} parent=23 // loop_footer
        %s539 = sadd.s32 %s537, 1
      $region51: #{tpu_custom_call.1} parent=23 // loop_footer_branch
        %536 = sbr.rel target = $region47
      $region52: #{tpu_custom_call.1} parent=23 // loop_exit
        _
      %v550 = vsel %vm262, %v542, -inf
      %v551 = vsel %vm263, %v543, -inf
      %v552 = vsel %vm266, %v550, -inf
      %v553 = vsel %vm266, %v551, -inf
      %v554 = vmax.f32 %v552, %v553
      %v555 = vrot.slane %v554, 4
      %v556 = vmax.f32 %v554, %v555
      %v557 = vrot.slane %v556, 2
      %v558 = vmax.f32 %v556, %v557
      %v559 = vrot.slane %v558, 1
      %v560 = vmax.f32 %v558, %v559
      %p561 = por %p535, %p185
      %s562 = scalar_select %p561, 1, 0
      %v563 = vstv %s562
      %vm564 = vcmp.eq.s32.totalorder %v563, 1
      %v565 = vsel %vm564, 0.0, %v560
      %v566 = vsel %vm283, %v542, -inf
      %v567 = vsel %vm284, %v543, -inf
      %v568 = vsel %vm266, %v566, -inf
      %v569 = vsel %vm266, %v567, -inf
      %v570 = vmax.f32 %v568, %v569
      %v571 = vrot.slane %v570, 4
      %v572 = vmax.f32 %v570, %v571
      %v573 = vrot.slane %v572, 2
      %v574 = vmax.f32 %v572, %v573
      %v575 = vrot.slane %v574, 1
      %v576 = vmax.f32 %v574, %v575
      %p577 = por %p535, %p202
      %s578 = scalar_select %p577, 1, 0
      %v579 = vstv %s578
      %vm580 = vcmp.eq.s32.totalorder %v579, 1
      %v581 = vsel %vm580, 0.0, %v576
      %v582 = vsel %vm303, %v542, -inf
      %v583 = vsel %vm304, %v543, -inf
      %v584 = vsel %vm266, %v582, -inf
      %v585 = vsel %vm266, %v583, -inf
      %v586 = vmax.f32 %v584, %v585
      %v587 = vrot.slane %v586, 4
      %v588 = vmax.f32 %v586, %v587
      %v589 = vrot.slane %v588, 2
      %v590 = vmax.f32 %v588, %v589
      %v591 = vrot.slane %v590, 1
      %v592 = vmax.f32 %v590, %v591
      %p593 = por %p535, %p219
      %s594 = scalar_select %p593, 1, 0
      %v595 = vstv %s594
      %vm596 = vcmp.eq.s32.totalorder %v595, 1
      %v597 = vsel %vm596, 0.0, %v592
      %v598 = vsel %vm323, %v542, -inf
      %v599 = vsel %vm324, %v543, -inf
      %v600 = vsel %vm266, %v598, -inf
      %v601 = vsel %vm266, %v599, -inf
      %v602 = vmax.f32 %v600, %v601
      %v603 = vrot.slane %v602, 4
      %v604 = vmax.f32 %v602, %v603
      %v605 = vrot.slane %v604, 2
      %v606 = vmax.f32 %v604, %v605
      %v607 = vrot.slane %v606, 1
      %v608 = vmax.f32 %v606, %v607
      %p609 = por %p535, %p236
      %s610 = scalar_select %p609, 1, 0
      %v611 = vstv %s610
      %vm612 = vcmp.eq.s32.totalorder %v611, 1
      %v613 = vsel %vm612, 0.0, %v608
      %v614 = vsel %vm341, %v565, %v581
      %v615 = vsel %vm343, %v614, %v597
      %v616 = vsel %vm345, %v615, %v613
      %vm617 = vcmask 27648
      %618 = vst.msk [vmem:[%s161] sm:$0xf] %vm617, %v346
      %619 = vst.msk [vmem:[%s161 + $0x4] sm:$0xf] %vm617, %v436
      %620 = vst.msk [vmem:[%s161 + $0x8] sm:$0xf] %vm617, %v526
      %621 = vst.msk [vmem:[%s161 + $0xc] sm:$0xf] %vm617, %v616
      %p622 = scmp.lt.s32.totalorder %s24, 5
      %s623 = scalar_select %p622, %s24, 5
      %p624 = scmp.lt.s32.totalorder %s23, 0
      %s625 = scalar_select %p624, %s23, 0
      %s626 = smul.addr %s623, 4
      %s627 = sadd.s32 %s625, %s626
      %s628 = smul.addr %s627, 4
      %s629 = scalar_lea.vmem %s2, %s628
      // Predicated region
      $region53: #{tpu_custom_call.1} parent=23 // pred_check
        %p630 = pneg %p81
      $region54: #{tpu_custom_call.1} parent=23 // pred_check_branch
        %632 = sbr.rel (%p630) target = $region56
      $region55: #{tpu_custom_call.1} parent=23 // pred_region
        _
      $region56: #{tpu_custom_call.1} parent=23 // pred_fallthru
        _
    $region24: #{tpu_custom_call.1} parent=5 // pred_fallthru
      _
    %p633 = scmp.le.s32.totalorder 2, %s14
    // Predicated region
    $region57: #{tpu_custom_call.1} parent=5 // pred_check
      %p634 = pneg %p633
    $region58: #{tpu_custom_call.1} parent=5 // pred_check_branch
      %636 = sbr.rel (%p634) target = $region60
    $region59: #{tpu_custom_call.1} parent=5 // pred_region
      %s637 = ssub.s32 %s14, 2
      // Predicated region
      $region61: #{tpu_custom_call.1} parent=59 // pred_check
        %p638 = pneg %p87
      $region62: #{tpu_custom_call.1} parent=59 // pred_check_branch
        %640 = sbr.rel (%p638) target = $region64
      $region63: #{tpu_custom_call.1} parent=59 // pred_region
        %p641 = scmp.lt.s32.totalorder %s26, 5
        %s642 = scalar_select %p641, %s26, 5
        %p643 = scmp.lt.s32.totalorder %s25, 0
        %s644 = scalar_select %p643, %s25, 0
        %s645 = smul.addr %s642, 4
        %s646 = sadd.s32 %s644, %s645
        %s647 = smul.addr %s646, 4
        %s648 = scalar_lea.vmem %s2, %s647
      $region64: #{tpu_custom_call.1} parent=59 // pred_fallthru
        _
    $region60: #{tpu_custom_call.1} parent=5 // pred_fallthru
      _
  $region6: #{tpu_custom_call.1} parent=0 // loop_footer
    %s18 = sadd.s32 1, %s14
  $region7: #{tpu_custom_call.1} parent=0 // loop_footer_branch
    %13 = sbr.rel target = $region3
  $region8: #{tpu_custom_call.1} parent=0 // loop_exit
    _

</llo_original>
